<compile_context>
chip_gen: v7x
topology: tpu7x:2x2x1
jax: 0.10.0
libtpu: 0.0.40
codegen_flags: <defaults>
</compile_context>

<pallas_src>
import jax
import jax.numpy as jnp
from jax import lax
from jax.experimental import pallas as pl
from jax.experimental.pallas import tpu as pltpu

HIDDEN = 30
LANE = 128
DEFAULT_TM = 16384            # rows per batch tile
MIN_TM = 1024                 # never shrink tiles below this just to add grid steps
TARGET_STEPS = 8              # aim for >= this many grid steps on large batches (v7x)
VMEM_LIMIT_BYTES = 48 * 1024 * 1024


def _round_up(x, m):
    return ((x + m - 1) // m) * m


def _choose_tiling(B, tm):
    """Pick (Bp, tm_eff, n_tiles).

    * Even-split tiles -> padding waste bounded by ~n_tiles*128 rows.
    * Large batches get >= TARGET_STEPS steps (v7x megacore sharding) as long as
      tiles stay >= MIN_TM rows.
    * Multi-tile case uses multiple-of-128 tiles (lane-dense out blocks satisfy
      the (8,128) BlockSpec constraint); single-tile case uses the full array.
    """
    B8 = _round_up(B, 8)
    cap = max(MIN_TM, _round_up(pl.cdiv(B8, TARGET_STEPS), LANE))
    tm = max(8, min(tm, cap))
    n = pl.cdiv(B8, tm)
    if n <= 1:
        return B8, B8, 1                         # single full-array tile
    tm_eff = _round_up(pl.cdiv(B8, n), LANE)     # even split, lane-aligned
    n = pl.cdiv(B8, tm_eff)
    return n * tm_eff, tm_eff, n


def actor_kernel(x_ref, w1_ref, b1_ref, w2_ref, b2_ref, o_ref):
    # fc1, transposed orientation: h^T = W1 @ x^T -> (H, TM).  The rhs (x tile,
    # shape (TM, S)) is contracted on its last dim, so no explicit transpose /
    # relayout of the batch tile is needed; MXU accumulates in f32.
    cdt = jnp.promote_types(x_ref.dtype, w1_ref.dtype)
    h = lax.dot_general(
        w1_ref[...].astype(cdt), x_ref[...].astype(cdt),
        dimension_numbers=(((1,), (1,)), ((), ())),
        preferred_element_type=jnp.float32)
    # bias + ReLU in f32 on the VPU, lane-dense (batch on lanes).
    h = jnp.maximum(h + b1_ref[...], 0.0)
    # out layer: y^T = W2 @ h^T -> (A, TM), f32 accumulation.
    y = jnp.dot(w2_ref[...], h.astype(w2_ref.dtype),
                preferred_element_type=jnp.float32)
    y = y + b2_ref[...]
    # tanh (EUP) * 2 in f32; store is a full-width lane-dense vst.
    o_ref[...] = (jnp.tanh(y) * 2.0).astype(o_ref.dtype)


def actor_forward(x, w1, b1, w2, b2, *, tm=DEFAULT_TM,
                  out_dtype=jnp.float32, transposed_output=False):
    """Actor forward pass.

    x : (B, states_len)            float32 or bfloat16
    w1: (30, states_len)           PyTorch fc1.weight layout (out, in)
    b1: (30,)
    w2: (actions_len, 30)          PyTorch out.weight layout (out, in)
    b2: (actions_len,)

    Returns (B, actions_len) in `out_dtype`, or the lane-dense (actions_len, B)
    result when transposed_output=True (skips the final tiny XLA transpose).
    """
    B, S = x.shape
    H, S1 = w1.shape
    A, H1 = w2.shape
    assert S1 == S and H1 == H

    b1c = b1.reshape(H, 1).astype(jnp.float32)
    b2c = b2.reshape(A, 1).astype(jnp.float32)

    Bp, tm_eff, n_tiles = _choose_tiling(B, tm)
    if Bp != B:
        x = jnp.pad(x, ((0, Bp - B), (0, 0)))

    def const_spec(shape):
        # Weights / biases: full-array blocks, VMEM-resident across the grid.
        return pl.BlockSpec(shape, lambda i: (0, 0))

    x_bytes = jnp.dtype(x.dtype).itemsize
    w_bytes = jnp.dtype(w1.dtype).itemsize
    o_bytes = jnp.dtype(out_dtype).itemsize
    cost = pl.CostEstimate(
        flops=2 * Bp * (S * H + H * A),
        transcendentals=Bp * A,
        bytes_accessed=(Bp * S * x_bytes + Bp * A * o_bytes
                        + (S * H + H * A) * w_bytes + (H + A) * 4),
    )

    out_t = pl.pallas_call(
        actor_kernel,
        out_shape=jax.ShapeDtypeStruct((A, Bp), out_dtype),
        grid=(n_tiles,),
        in_specs=[
            pl.BlockSpec((tm_eff, S), lambda i: (i, 0)),      # x: tiled over batch
            const_spec((H, S)),                               # W1 (out, in)
            const_spec((H, 1)),                               # b1
            const_spec((A, H)),                               # W2 (out, in)
            const_spec((A, 1)),                               # b2
        ],
        out_specs=pl.BlockSpec((A, tm_eff), lambda i: (0, i)),  # lane-dense out^T
        compiler_params=pltpu.CompilerParams(
            dimension_semantics=("parallel",),                # v7x megacore sharding
            vmem_limit_bytes=VMEM_LIMIT_BYTES,
        ),
        cost_estimate=cost,
    )(x, w1, b1c, w2, b2c)

    if Bp != B:
        out_t = out_t[:, :B]
    if transposed_output:
        return out_t
    return out_t.T            # (B, A) to match the PyTorch module's output layout


def init_actor_params(key, states_len, actions_len, hidden=HIDDEN):
    """Deterministic init mimicking PyTorch nn.Linear default (U[-1/sqrt(fan_in), +]).
    Weights are kept in PyTorch (out_features, in_features) orientation."""
    k1, k2, k3, k4 = jax.random.split(key, 4)
    bound1 = 1.0 / jnp.sqrt(states_len)
    bound2 = 1.0 / jnp.sqrt(hidden)
    w1 = jax.random.uniform(k1, (hidden, states_len), jnp.float32, -bound1, bound1)
    b1 = jax.random.uniform(k2, (hidden,), jnp.float32, -bound1, bound1)
    w2 = jax.random.uniform(k3, (actions_len, hidden), jnp.float32, -bound2, bound2)
    b2 = jax.random.uniform(k4, (actions_len,), jnp.float32, -bound2, bound2)
    return w1, b1, w2, b2


def actor_ref(x, w1, b1, w2, b2):
    """Pure-JAX reference (f32), PyTorch weight orientation."""
    h = jnp.maximum(x @ w1.T + b1, 0.0)
    return jnp.tanh(h @ w2.T + b2) * 2.0


if __name__ == "__main__":
    key = jax.random.PRNGKey(0)
    kx, kp, kx2 = jax.random.split(key, 3)

    states_len = 16     # small synthetic obs dim
    actions_len = 4     # small synthetic action dim
    w1, b1, w2, b2 = init_actor_params(kp, states_len, actions_len)

    # --- Test 1: f32, tiny batch (single-tile path) ----------------------------
    batch = 2
    x = jax.random.normal(kx, (batch, states_len), jnp.float32)
    out = jax.block_until_ready(actor_forward(x, w1, b1, w2, b2))
    ref = actor_ref(x, w1, b1, w2, b2)
    assert out.shape == (batch, actions_len)
    assert jnp.allclose(out, ref, atol=1e-5, rtol=1e-5), "f32 mismatch vs reference"

    # --- Test 2: multi-tile grid path (tm=128 -> 8 grid steps over 1000 rows) --
    batch2 = 1000
    x2 = jax.random.normal(kx2, (batch2, states_len), jnp.float32)
    out2 = jax.block_until_ready(actor_forward(x2, w1, b1, w2, b2, tm=128))
    ref2 = actor_ref(x2, w1, b1, w2, b2)
    assert out2.shape == (batch2, actions_len)
    assert jnp.allclose(out2, ref2, atol=1e-5, rtol=1e-5), "grid mismatch vs reference"

    # --- Test 3: bf16 x/weights (halved HBM traffic), f32 accumulation ---------
    x_bf = x2.astype(jnp.bfloat16)
    w1_bf = w1.astype(jnp.bfloat16)
    w2_bf = w2.astype(jnp.bfloat16)
    out_bf = jax.block_until_ready(actor_forward(x_bf, w1_bf, b1, w2_bf, b2, tm=128))
    ref_bf = actor_ref(x_bf.astype(jnp.float32), w1_bf.astype(jnp.float32), b1,
                       w2_bf.astype(jnp.float32), b2)
    assert out_bf.shape == (batch2, actions_len)
    assert jnp.allclose(out_bf, ref_bf, atol=5e-2, rtol=5e-2), "bf16 mismatch vs reference"

    # --- Test 4: lane-dense transposed output + bf16 output dtype --------------
    out_t = jax.block_until_ready(
        actor_forward(x2, w1, b1, w2, b2, tm=128,
                      out_dtype=jnp.bfloat16, transposed_output=True))
    assert out_t.shape == (actions_len, batch2) and out_t.dtype == jnp.bfloat16
    assert jnp.allclose(out_t.T.astype(jnp.float32), ref2, atol=2e-2, rtol=2e-2), \
        "bf16-output mismatch vs reference"

    print("KERNEL_OK")
</pallas_src>

<mosaic_0001>
module attributes {stable_mosaic.version = 11 : i64} {
  func.func @actor_kernel(%arg0: i32, %arg1: memref<8x16xf32, #tpu.memory_space<vmem>>, %arg2: memref<30x16xf32, #tpu.memory_space<vmem>>, %arg3: memref<30x1xf32, #tpu.memory_space<vmem>>, %arg4: memref<4x30xf32, #tpu.memory_space<vmem>>, %arg5: memref<4x1xf32, #tpu.memory_space<vmem>>, %arg6: memref<4x8xf32, #tpu.memory_space<vmem>>) attributes {dimension_semantics = [#tpu.dimension_semantics<parallel>], iteration_bounds = array<i64: 1>, scalar_prefetch = 0 : i64, scratch_operands = 0 : i64, tpu.core_type = #tpu.core_type<tc>, window_params = [{transform_indices = @transform_0, window_bounds = array<i64: 8, 16>}, {pipeline_mode = #tpu.pipeline_mode<synchronous>, transform_indices = @transform_1, window_bounds = array<i64: 30, 16>}, {pipeline_mode = #tpu.pipeline_mode<synchronous>, transform_indices = @transform_2, window_bounds = array<i64: 30, 1>}, {pipeline_mode = #tpu.pipeline_mode<synchronous>, transform_indices = @transform_3, window_bounds = array<i64: 4, 30>}, {pipeline_mode = #tpu.pipeline_mode<synchronous>, transform_indices = @transform_4, window_bounds = array<i64: 4, 1>}, {transform_indices = @transform_5, window_bounds = array<i64: 4, 8>}]} {
    %c0 = arith.constant 0 : index
    %c0_0 = arith.constant 0 : index
    %0 = vector.load %arg2[%c0, %c0_0] : memref<30x16xf32, #tpu.memory_space<vmem>>, vector<30x16xf32>
    %c0_1 = arith.constant 0 : index
    %c0_2 = arith.constant 0 : index
    %1 = vector.load %arg1[%c0_1, %c0_2] : memref<8x16xf32, #tpu.memory_space<vmem>>, vector<8x16xf32>
    %cst = arith.constant dense<0.000000e+00> : vector<30x8xf32>
    %2 = tpu.matmul %0, %1, %cst {dimension_numbers = #tpu.dot_dimension_numbers<[1], [1], [0], [0], [0, 0, 1, 0], [], []>} : vector<30x16xf32>, vector<8x16xf32>, vector<30x8xf32> -> vector<30x8xf32>
    %c0_3 = arith.constant 0 : index
    %c0_4 = arith.constant 0 : index
    %3 = vector.load %arg3[%c0_3, %c0_4] : memref<30x1xf32, #tpu.memory_space<vmem>>, vector<30x1xf32>
    %4 = vector.broadcast %3 : vector<30x1xf32> to vector<30x8xf32>
    %5 = arith.addf %2, %4 : vector<30x8xf32>
    %cst_5 = arith.constant 0.000000e+00 : f32
    %6 = vector.broadcast %cst_5 : f32 to vector<30x8xf32>
    %7 = arith.maximumf %5, %6 : vector<30x8xf32>
    %c0_6 = arith.constant 0 : index
    %c0_7 = arith.constant 0 : index
    %8 = vector.load %arg4[%c0_6, %c0_7] : memref<4x30xf32, #tpu.memory_space<vmem>>, vector<4x30xf32>
    %cst_8 = arith.constant dense<0.000000e+00> : vector<4x8xf32>
    %9 = tpu.matmul %8, %7, %cst_8 {dimension_numbers = #tpu.dot_dimension_numbers<[1], [0], [0], [1], [0, 0, 1, 1], [], []>} : vector<4x30xf32>, vector<30x8xf32>, vector<4x8xf32> -> vector<4x8xf32>
    %c0_9 = arith.constant 0 : index
    %c0_10 = arith.constant 0 : index
    %10 = vector.load %arg5[%c0_9, %c0_10] : memref<4x1xf32, #tpu.memory_space<vmem>>, vector<4x1xf32>
    %11 = vector.broadcast %10 : vector<4x1xf32> to vector<4x8xf32>
    %12 = arith.addf %9, %11 : vector<4x8xf32>
    %13 = math.tanh %12 : vector<4x8xf32>
    %cst_11 = arith.constant 2.000000e+00 : f32
    %14 = vector.broadcast %cst_11 : f32 to vector<4x8xf32>
    %15 = arith.mulf %13, %14 : vector<4x8xf32>
    %c0_12 = arith.constant 0 : index
    %c0_13 = arith.constant 0 : index
    %16 = vector.load %arg6[%c0_12, %c0_13] : memref<4x8xf32, #tpu.memory_space<vmem>>, vector<4x8xf32>
    tpu.vector_store %arg6[%c0_12, %c0_13], %15 {strides = array<i32>} : memref<4x8xf32, #tpu.memory_space<vmem>>, vector<4x8xf32>,
    return
  }
  func.func @transform_0(%arg0: i32) -> (i32, i32) {
    %c0_i32 = arith.constant 0 : i32
    %c0_i32_0 = arith.constant 0 : i32
    return %arg0, %c0_i32 : i32, i32
  }
  func.func @transform_1(%arg0: i32) -> (i32, i32) {
    %c0_i32 = arith.constant 0 : i32
    %c0_i32_0 = arith.constant 0 : i32
    %c0_i32_1 = arith.constant 0 : i32
    return %c0_i32, %c0_i32_0 : i32, i32
  }
  func.func @transform_2(%arg0: i32) -> (i32, i32) {
    %c0_i32 = arith.constant 0 : i32
    %c0_i32_0 = arith.constant 0 : i32
    %c0_i32_1 = arith.constant 0 : i32
    return %c0_i32, %c0_i32_0 : i32, i32
  }
  func.func @transform_3(%arg0: i32) -> (i32, i32) {
    %c0_i32 = arith.constant 0 : i32
    %c0_i32_0 = arith.constant 0 : i32
    %c0_i32_1 = arith.constant 0 : i32
    return %c0_i32, %c0_i32_0 : i32, i32
  }
  func.func @transform_4(%arg0: i32) -> (i32, i32) {
    %c0_i32 = arith.constant 0 : i32
    %c0_i32_0 = arith.constant 0 : i32
    %c0_i32_1 = arith.constant 0 : i32
    return %c0_i32, %c0_i32_0 : i32, i32
  }
  func.func @transform_5(%arg0: i32) -> (i32, i32) {
    %c0_i32 = arith.constant 0 : i32
    %c0_i32_0 = arith.constant 0 : i32
    return %c0_i32, %arg0 : i32, i32
  }
}

</mosaic_0001>

<llo_original>
// kernel: tpu_custom_call.1
$region0: #{tpu_custom_call.1}
  #allocation0 [shape = 'u32[]', space=smem, size = 0x4, offset = 0x4, fixed_abs, tag = 'smem constant byte address 0x4 - core index']
  #allocation1 [shape = 'u32[144,128]{1,0:T(1,128)}', space=vmem, size = 0x12000, scoped, tag = 'internal scratch']
  %s0 = inlined_call_operand.vmem [shape: f32[8,16], index: 0, kind: input, shape index: {}]
  %s1 = inlined_call_operand.vmem [shape: f32[30,16], index: 1, kind: input, shape index: {}]
  %s2 = inlined_call_operand.vmem [shape: f32[30,1], index: 2, kind: input, shape index: {}]
  %s3 = inlined_call_operand.vmem [shape: f32[4,30], index: 3, kind: input, shape index: {}]
  %s4 = inlined_call_operand.vmem [shape: f32[4,1], index: 4, kind: input, shape index: {}]
  %s5 = inlined_call_operand.hbm [shape: f32[4,8], index: 5, kind: output, shape index: {}]
  %s6 = sld [smem:[#allocation0]]
  $region30: #{tpu_custom_call.1} parent=0
    _
  %s8 = ssub.s32 1, %s6
  %s9 = scalar_select 0, %s8, %s6
  $region1: #{tpu_custom_call.1} parent=0
    #allocation2 [shape = 'u8[2048]{0}', space=vmem, size = 0x800, scoped, tag = 'output window, operand 0, single buffered']
    #allocation3 [shape = 's32[1]{0}', space=sflag, size = 0x4, scoped, tag = 'scoped memory for tpu_custom_call.1']
    %10 = vsyncpa [#allocation3], 0
    // Predicated region
    $region2: #{tpu_custom_call.1} parent=1 // pred_check
      _
    $region3: #{tpu_custom_call.1} parent=1 // pred_check_branch
      %12 = sbr.rel (0) target = $region5
    $region4: #{tpu_custom_call.1} parent=1 // pred_region
      _
    $region5: #{tpu_custom_call.1} parent=1 // pred_fallthru
      _
    // Predicated region
    $region6: #{tpu_custom_call.1} parent=1 // pred_check
      _
    $region7: #{tpu_custom_call.1} parent=1 // pred_check_branch
      %14 = sbr.rel (0) target = $region9
    $region8: #{tpu_custom_call.1} parent=1 // pred_region
      _
    $region9: #{tpu_custom_call.1} parent=1 // pred_fallthru
      _
    // Predicated region
    $region10: #{tpu_custom_call.1} parent=1 // pred_check
      _
    $region11: #{tpu_custom_call.1} parent=1 // pred_check_branch
      %16 = sbr.rel (0) target = $region13
    $region12: #{tpu_custom_call.1} parent=1 // pred_region
      _
    $region13: #{tpu_custom_call.1} parent=1 // pred_fallthru
      _
    // Predicated region
    $region14: #{tpu_custom_call.1} parent=1 // pred_check
      _
    $region15: #{tpu_custom_call.1} parent=1 // pred_check_branch
      %18 = sbr.rel (0) target = $region17
    $region16: #{tpu_custom_call.1} parent=1 // pred_region
      _
    $region17: #{tpu_custom_call.1} parent=1 // pred_fallthru
      _
    // Predicated region
    $region18: #{tpu_custom_call.1} parent=1 // pred_check
      _
    $region19: #{tpu_custom_call.1} parent=1 // pred_check_branch
      %20 = sbr.rel (0) target = $region21
    $region20: #{tpu_custom_call.1} parent=1 // pred_region
      _
    $region21: #{tpu_custom_call.1} parent=1 // pred_fallthru
      _
    %v21 = vld [vmem:[%s1] sm:$0xff]
    %v22 = vld [vmem:[%s1 + $0x8] sm:$0xff]
    %v23 = vld [vmem:[%s1 + $0x10] sm:$0xff]
    %v24 = vld [vmem:[%s1 + $0x18] sm:$0x3f]
    %v25 = vld [vmem:[%s0] sm:$0xff]
    %v26 = vld [vmem:[%s2] sm:$0xff]
    %v27 = vld [vmem:[%s2 + $0x8] sm:$0xff]
    %v28 = vld [vmem:[%s2 + $0x10] sm:$0xff]
    %v29 = vld [vmem:[%s2 + $0x18] sm:$0x3f]
    %31 = vset.pattern.permute.xlu0 0
    %32 = vperm.xlu0 %31, %v26
    %v33 = vpop.permute.xlu0 %32
    %36 = vset.pattern.permute.xlu0 0
    %37 = vperm.xlu0 %36, %v27
    %v38 = vpop.permute.xlu0 %37
    %41 = vset.pattern.permute.xlu0 0
    %42 = vperm.xlu0 %41, %v28
    %v43 = vpop.permute.xlu0 %42
    %46 = vset.pattern.permute.xlu0 0
    %47 = vperm.xlu0 %46, %v29
    %v48 = vpop.permute.xlu0 %47
    %vm50 = vcmask 130048
    %v52 = vsel %vm50, %v21, 0
    %v55 = vsel %vm50, %v22, 0
    %v58 = vsel %vm50, %v23, 0
    %v61 = vsel %vm50, %v24, 0
    %v64 = vsel %vm50, %v25, 0
    %66 = vmatprep.subr.mxu0 0.0
    %67 = vmatpush1.xpose.msra.mxu0 %v64
    %68 = vmatprep.subr.mxu0 0.0
    %69 = vmatpush1.xpose.msra.mxu0 0.0
    %70 = vmatprep.subr.mxu0 0.0
    %71 = vmatpush1.xpose.msra.mxu0 0.0
    %72 = vmatprep.subr.mxu0 0.0
    %73 = vmatpush1.xpose.msra.mxu0 0.0
    %74 = vmatprep.subr.mxu0 0.0
    %75 = vmatpush1.xpose.msra.mxu0 0.0
    %76 = vmatprep.subr.mxu0 0.0
    %77 = vmatpush1.xpose.msra.mxu0 0.0
    %78 = vmatprep.subr.mxu0 0.0
    %79 = vmatpush1.xpose.msra.mxu0 0.0
    %80 = vmatprep.subr.mxu0 0.0
    %81 = vmatpush1.xpose.msra.mxu0 0.0
    %82 = vmatprep.subr.mxu0 0.0
    %83 = vmatpush1.xpose.msra.mxu0 0.0
    %84 = vmatprep.subr.mxu0 0.0
    %85 = vmatpush1.xpose.msra.mxu0 0.0
    %86 = vmatprep.subr.mxu0 0.0
    %87 = vmatpush1.xpose.msra.mxu0 0.0
    %88 = vmatprep.subr.mxu0 0.0
    %89 = vmatpush1.xpose.msra.mxu0 0.0
    %90 = vmatprep.subr.mxu0 0.0
    %91 = vmatpush1.xpose.msra.mxu0 0.0
    %92 = vmatprep.subr.mxu0 0.0
    %93 = vmatpush1.xpose.msra.mxu0 0.0
    %94 = vmatprep.subr.mxu0 0.0
    %95 = vmatpush1.xpose.msra.mxu0 0.0
    %96 = vmatprep.subr.mxu0 0.0
    %97 = vmatpush1.xpose.msra.mxu0 0.0
    %98 = vmatprep.subr.mxu0 0.0
    %99 = vmatpush1.xpose.msra.mxu0 0.0
    %100 = vmatprep.subr.mxu0 0.0
    %101 = vmatpush1.xpose.msra.mxu0 0.0
    %102 = vmatprep.subr.mxu0 0.0
    %103 = vmatpush1.xpose.msra.mxu0 0.0
    %104 = vmatprep.subr.mxu0 0.0
    %105 = vmatpush1.xpose.msra.mxu0 0.0
    %106 = vmatprep.subr.mxu0 0.0
    %107 = vmatpush1.xpose.msra.mxu0 0.0
    %108 = vmatprep.subr.mxu0 0.0
    %109 = vmatpush1.xpose.msra.mxu0 0.0
    %110 = vmatprep.subr.mxu0 0.0
    %111 = vmatpush1.xpose.msra.mxu0 0.0
    %112 = vmatprep.subr.mxu0 0.0
    %113 = vmatpush1.xpose.msra.mxu0 0.0
    %114 = vmatprep.subr.mxu0 0.0
    %115 = vmatpush1.xpose.msra.mxu0 0.0
    %116 = vmatprep.subr.mxu0 0.0
    %117 = vmatpush1.xpose.msra.mxu0 0.0
    %118 = vmatprep.subr.mxu0 0.0
    %119 = vmatpush1.xpose.msra.mxu0 0.0
    %120 = vmatprep.subr.mxu0 0.0
    %121 = vmatpush1.xpose.msra.mxu0 0.0
    %122 = vmatprep.subr.mxu0 0.0
    %123 = vmatpush1.xpose.msra.mxu0 0.0
    %124 = vmatprep.subr.mxu0 0.0
    %125 = vmatpush1.xpose.msra.mxu0 0.0
    %126 = vmatprep.subr.mxu0 0.0
    %127 = vmatpush1.xpose.msra.mxu0 0.0
    %128 = vmatprep.subr.mxu0 0.0
    %129 = vmatpush1.xpose.msra.mxu0 0.0
    %130 = vmatprep.mubr.f32.mxu0 0.0
    %131 = vmatmul.mubr.f32.gmra.mrb[0].mxu0 %v52
    %v132 = vpop.f32.mrb[0].mxu0
    %v133 = vadd.f32 %v33, %v132
    %v134 = vpop.f32.mrb[0].mxu0
    %135 = vmatprep.mubr.f32.mxu0 0.0
    %136 = vmatmul.mubr.f32.gmra.mrb[0].mxu0 %v55
    %v137 = vpop.f32.mrb[0].mxu0
    %v138 = vadd.f32 %v38, %v137
    %v139 = vpop.f32.mrb[0].mxu0
    %140 = vmatprep.mubr.f32.mxu0 0.0
    %141 = vmatmul.mubr.f32.gmra.mrb[0].mxu0 %v58
    %v142 = vpop.f32.mrb[0].mxu0
    %v143 = vadd.f32 %v43, %v142
    %v144 = vpop.f32.mrb[0].mxu0
    %145 = vmatprep.mubr.f32.mxu0 0.0
    %146 = vmatmul.mubr.f32.gmra.mrb[0].mxu0 %v61
    %v147 = vpop.f32.mrb[0].mxu0
    %v148 = vadd.f32 %v48, %v147
    %v149 = vpop.f32.mrb[0].mxu0
    %150 = vdwg.mxu0
    %v151 = vmax.f32 %v133, 0.0
    %v152 = vmax.f32 %v138, 0.0
    %v153 = vmax.f32 %v143, 0.0
    %v154 = vmax.f32 %v148, 0.0
    %v155 = vld [vmem:[%s3] sm:$0xf]
    %v156 = vld [vmem:[%s4] sm:$0xf]
    %158 = vset.pattern.permute.xlu0 0
    %159 = vperm.xlu0 %158, %v156
    %v160 = vpop.permute.xlu0 %159
    %vm162 = vcmask 244736
    %v164 = vsel %vm162, %v155, 0
    %vm166 = vcmask 1045504
    %v168 = vsel %vm166, %v154, 0
    %170 = vmatprep.subr.mxu0 0.0
    %171 = vmatpush1.msra.mxu0 %v151
    %172 = vmatprep.subr.mxu0 0.0
    %173 = vmatpush1.msra.mxu0 %v152
    %174 = vmatprep.subr.mxu0 0.0
    %175 = vmatpush1.msra.mxu0 %v153
    %176 = vmatprep.subr.mxu0 0.0
    %177 = vmatpush1.msra.mxu0 %v168
    %178 = vmatprep.subr.mxu0 0.0
    %179 = vmatpush1.msra.mxu0 0.0
    %180 = vmatprep.subr.mxu0 0.0
    %181 = vmatpush1.msra.mxu0 0.0
    %182 = vmatprep.subr.mxu0 0.0
    %183 = vmatpush1.msra.mxu0 0.0
    %184 = vmatprep.subr.mxu0 0.0
    %185 = vmatpush1.msra.mxu0 0.0
    %186 = vmatprep.subr.mxu0 0.0
    %187 = vmatpush1.msra.mxu0 0.0
    %188 = vmatprep.subr.mxu0 0.0
    %189 = vmatpush1.msra.mxu0 0.0
    %190 = vmatprep.subr.mxu0 0.0
    %191 = vmatpush1.msra.mxu0 0.0
    %192 = vmatprep.subr.mxu0 0.0
    %193 = vmatpush1.msra.mxu0 0.0
    %194 = vmatprep.subr.mxu0 0.0
    %195 = vmatpush1.msra.mxu0 0.0
    %196 = vmatprep.subr.mxu0 0.0
    %197 = vmatpush1.msra.mxu0 0.0
    %198 = vmatprep.subr.mxu0 0.0
    %199 = vmatpush1.msra.mxu0 0.0
    %200 = vmatprep.subr.mxu0 0.0
    %201 = vmatpush1.msra.mxu0 0.0
    %202 = vmatprep.subr.mxu0 0.0
    %203 = vmatpush1.msra.mxu0 0.0
    %204 = vmatprep.subr.mxu0 0.0
    %205 = vmatpush1.msra.mxu0 0.0
    %206 = vmatprep.subr.mxu0 0.0
    %207 = vmatpush1.msra.mxu0 0.0
    %208 = vmatprep.subr.mxu0 0.0
    %209 = vmatpush1.msra.mxu0 0.0
    %210 = vmatprep.subr.mxu0 0.0
    %211 = vmatpush1.msra.mxu0 0.0
    %212 = vmatprep.subr.mxu0 0.0
    %213 = vmatpush1.msra.mxu0 0.0
    %214 = vmatprep.subr.mxu0 0.0
    %215 = vmatpush1.msra.mxu0 0.0
    %216 = vmatprep.subr.mxu0 0.0
    %217 = vmatpush1.msra.mxu0 0.0
    %218 = vmatprep.subr.mxu0 0.0
    %219 = vmatpush1.msra.mxu0 0.0
    %220 = vmatprep.subr.mxu0 0.0
    %221 = vmatpush1.msra.mxu0 0.0
    %222 = vmatprep.subr.mxu0 0.0
    %223 = vmatpush1.msra.mxu0 0.0
    %224 = vmatprep.subr.mxu0 0.0
    %225 = vmatpush1.msra.mxu0 0.0
    %226 = vmatprep.subr.mxu0 0.0
    %227 = vmatpush1.msra.mxu0 0.0
    %228 = vmatprep.subr.mxu0 0.0
    %229 = vmatpush1.msra.mxu0 0.0
    %230 = vmatprep.subr.mxu0 0.0
    %231 = vmatpush1.msra.mxu0 0.0
    %232 = vmatprep.subr.mxu0 0.0
    %233 = vmatpush1.msra.mxu0 0.0
    %234 = vmatprep.mubr.f32.mxu0 0.0
    %235 = vmatmul.mubr.f32.gmra.mrb[0].mxu0 %v164
    %v236 = vpop.f32.mrb[0].mxu0
    %v237 = vadd.f32 %v160, %v236
    %v238 = vpop.f32.mrb[0].mxu0
    %239 = vdwg.mxu0
    %v240 = vtanh.pop %v237
    %v241 = vmul.f32 %v240, 2.0
    %vm242 = vcmask 60416
    %243 = vst.msk [vmem:[#allocation2] sm:$0xf] %vm242, %v241
    // Predicated region
    $region22: #{tpu_custom_call.1} parent=1 // pred_check
      _
    $region23: #{tpu_custom_call.1} parent=1 // pred_check_branch
      %245 = sbr.rel (0) target = $region25
    $region24: #{tpu_custom_call.1} parent=1 // pred_region
      %s247 = ssub.s32 64, 64
      %248 = vsyncadd [#allocation3], %s247
      %s250 = sshll.u32 [#allocation2], 4
      %s251 = int_to_ptr.vmem [resolvable:$true] %s250
      %253 = dma.vmem_to_hbm [thread:$0]  %s251, 64, %s5, [#allocation3]
    $region25: #{tpu_custom_call.1} parent=1 // pred_fallthru
      _
    // Predicated region
    $region26: #{tpu_custom_call.1} parent=1 // pred_check
      _
    $region27: #{tpu_custom_call.1} parent=1 // pred_check_branch
      %255 = sbr.rel (0) target = $region29
    $region28: #{tpu_custom_call.1} parent=1 // pred_region
      %256 = dma.done [#allocation3], 64
    $region29: #{tpu_custom_call.1} parent=1 // pred_fallthru
      _
    %257 = vsyncpa [#allocation3], 1

</llo_original>
